<compile_context>
chip_gen: v6e
topology: v6e:2x2x1
jax: 0.10.0
libtpu: 0.0.40
codegen_flags: <defaults>
</compile_context>

<pallas_src>
import functools

import jax
import jax.numpy as jnp
from jax import lax
from jax.experimental import pallas as pl
from jax.experimental.pallas import tpu as pltpu


# ---------------------------------------------------------------------------
# Kernels
# ---------------------------------------------------------------------------

def _poolbn_s1_kernel(pool_type, x_ref, scale_ref, bias_ref, *rest,
                      K, P, H, W, H_out, W_out, C, NB):
    """Stride-1 path, fused W*C lane axis: folded BN -> kw pass -> kh pass."""
    if pool_type == "avg":
        inv_ref, o_ref, pad_ref, hbuf_ref = rest
    else:
        inv_ref = None
        o_ref, pad_ref, hbuf_ref = rest

    f32 = jnp.float32
    Hp = H + 2 * P
    WC, WpC, WoC = W * C, (W + 2 * P) * C, W_out * C
    pad_val = 0.0 if pool_type == "avg" else -jnp.inf  # torch MaxPool pads with -inf

    # Constant halo: only the 4 border strips (written each step; interior is fully
    # overwritten below, so no full zero-fill of the scratch).
    if P > 0:
        pad_ref[:, 0:P, :] = jnp.full((NB, P, WpC), pad_val, f32)
        pad_ref[:, Hp - P:Hp, :] = jnp.full((NB, P, WpC), pad_val, f32)
        pad_ref[:, P:P + H, 0:P * C] = jnp.full((NB, H, P * C), pad_val, f32)
        pad_ref[:, P:P + H, P * C + WC:WpC] = jnp.full((NB, H, P * C), pad_val, f32)

    # Folded BatchNorm: single FMA, scale/bias pre-tiled along the fused lane axis.
    pad_ref[:, P:P + H, P * C:P * C + WC] = (
        x_ref[...].astype(f32) * scale_ref[...] + bias_ref[...])

    # Horizontal (kw) pass: K unit-stride fused-lane slices -> (NB, Hp, W_out*C).
    def htap(kw):
        return pad_ref[:, :, pl.ds(kw * C, WoC)]

    acc = htap(0)
    for kw in range(1, K):
        t = htap(kw)
        acc = jnp.maximum(acc, t) if pool_type == "max" else acc + t
    hbuf_ref[...] = acc

    # Vertical (kh) pass: K unit-stride row slices -> (NB, H_out, W_out*C).
    def vtap(kh):
        return hbuf_ref[:, pl.ds(kh, H_out), :]

    acc = vtap(0)
    for kh in range(1, K):
        t = vtap(kh)
        acc = jnp.maximum(acc, t) if pool_type == "max" else acc + t

    if pool_type == "avg":
        # count_include_pad=False: reciprocal valid counts, pre-broadcast in glue.
        acc = acc * inv_ref[...]
    o_ref[...] = acc.astype(o_ref.dtype)


def _poolbn_strided_kernel(pool_type, x_ref, scale_ref, bias_ref, *rest,
                           K, S, P, H, W, H_out, W_out, C, NB):
    """Stride>1 path, unfused NHWC: BN -> kh pass (major-axis stride) -> kw pass
    (the only pass issuing strided sublane loads)."""
    if pool_type == "avg":
        inv_ref, o_ref, pad_ref, vbuf_ref = rest
    else:
        inv_ref = None
        o_ref, pad_ref, vbuf_ref = rest

    f32 = jnp.float32
    Hp, Wp = H + 2 * P, W + 2 * P
    pad_val = 0.0 if pool_type == "avg" else -jnp.inf

    if P > 0:
        pad_ref[:, 0:P, :, :] = jnp.full((NB, P, Wp, C), pad_val, f32)
        pad_ref[:, Hp - P:Hp, :, :] = jnp.full((NB, P, Wp, C), pad_val, f32)
        pad_ref[:, P:P + H, 0:P, :] = jnp.full((NB, H, P, C), pad_val, f32)
        pad_ref[:, P:P + H, Wp - P:Wp, :] = jnp.full((NB, H, P, C), pad_val, f32)

    pad_ref[:, P:P + H, P:P + W, :] = (
        x_ref[...].astype(f32) * scale_ref[...] + bias_ref[...])

    # Vertical (kh) pass first: the stride lands on the major H axis.
    def vtap(kh):
        return pad_ref[:, pl.ds(kh, H_out, stride=S), :, :]

    acc = vtap(0)
    for kh in range(1, K):
        t = vtap(kh)
        acc = jnp.maximum(acc, t) if pool_type == "max" else acc + t
    vbuf_ref[...] = acc  # (NB, H_out, Wp, C)

    # Horizontal (kw) pass: strided sublane (W axis) loads confined to this pass.
    def htap(kw):
        return vbuf_ref[:, :, pl.ds(kw, W_out, stride=S), :]

    acc = htap(0)
    for kw in range(1, K):
        t = htap(kw)
        acc = jnp.maximum(acc, t) if pool_type == "max" else acc + t

    if pool_type == "avg":
        acc = acc * inv_ref[...]  # (1, H_out, W_out, 1): lane-splat, nearly free
    o_ref[...] = acc.astype(o_ref.dtype)


# ---------------------------------------------------------------------------
# Glue helpers
# ---------------------------------------------------------------------------

def _fold_bn(x_nhwc, params, eps, training):
    gamma, beta = params["bn_gamma"], params["bn_beta"]
    if training:
        mean = jnp.mean(x_nhwc, axis=(0, 1, 2))
        var = jnp.var(x_nhwc, axis=(0, 1, 2))  # biased variance, like PyTorch's forward
    else:
        mean, var = params["bn_running_mean"], params["bn_running_var"]
    scale = (gamma * lax.rsqrt(var.astype(jnp.float32) + eps)).astype(jnp.float32)
    bias = beta.astype(jnp.float32) - mean.astype(jnp.float32) * scale
    return scale, bias


def _avg_inv_counts(H, W, H_out, W_out, K, S, P):
    """count_include_pad=False reciprocal valid counts, shape (H_out, W_out), f32."""
    oh = jnp.arange(H_out) * S - P
    ow = jnp.arange(W_out) * S - P
    cnt_h = jnp.minimum(oh + K, H) - jnp.maximum(oh, 0)
    cnt_w = jnp.minimum(ow + K, W) - jnp.maximum(ow, 0)
    return 1.0 / (cnt_h[:, None] * cnt_w[None, :]).astype(jnp.float32)


def _vmem_budget():
    """(vmem_limit_bytes, per-step block budget) derived from the chip's VMEM size."""
    try:
        cap = int(pltpu.get_tpu_info().vmem_capacity_bytes)  # 128 MiB v5e/v6e, 64 MiB v7x
    except Exception:
        cap = 64 << 20                                       # conservative (v7x) fallback
    limit = max(min(cap - (16 << 20), 100 << 20), 24 << 20)  # leave compiler headroom
    return limit, (limit * 3) // 4


def _pick_batch_block(N, per_image_bytes, budget_bytes,
                      min_block_bytes=512 << 10, target_steps=8):
    """Batch block that fits the VMEM budget, does enough work per step to amortize the
    ~0.35us step overhead, and leaves >= target_steps grid steps for DMA/compute overlap."""
    per_image_bytes = max(per_image_bytes, 1)
    nb_cap = max(1, budget_bytes // per_image_bytes)
    nb_size = -(-min_block_bytes // per_image_bytes)
    nb_steps = -(-N // target_steps)
    return int(max(1, min(max(nb_size, nb_steps), nb_cap, N)))


# ---------------------------------------------------------------------------
# Forward wrappers
# ---------------------------------------------------------------------------

def poolbn_forward_nhwc(x_nhwc, params, *, pool_type, kernel_size, stride, padding,
                        eps=1e-5, training=True):
    """NHWC entry point (no transposes).  Returns NHWC output."""
    pool_type = pool_type.lower()
    if pool_type not in ("max", "avg"):
        raise ValueError(pool_type)

    N, H, W, C = x_nhwc.shape
    K, S, P = kernel_size, stride, padding
    H_out = (H + 2 * P - K) // S + 1
    W_out = (W + 2 * P - K) // S + 1
    Hp, Wp = H + 2 * P, W + 2 * P
    io_dtype = x_nhwc.dtype

    scale, bias = _fold_bn(x_nhwc, params, eps, training)

    vmem_limit, budget = _vmem_budget()
    itemsize = jnp.dtype(io_dtype).itemsize
    buf_elems = (Hp * W_out * C) if S == 1 else (H_out * Wp * C)
    per_image = (2 * H * W * C * itemsize            # double-buffered input block
                 + 2 * H_out * W_out * C * itemsize  # double-buffered output block
                 + (Hp * Wp * C + buf_elems) * 4)    # f32 scratches
    NB = _pick_batch_block(N, per_image, budget)

    grid_n = -(-N // NB)
    N_pad = grid_n * NB

    if S == 1:
        # Lane-dense fused W*C layout; the reshapes are free (no data movement).
        x_in = x_nhwc.reshape(N, H, W * C)
        if N_pad != N:
            x_in = jnp.pad(x_in, ((0, N_pad - N), (0, 0), (0, 0)))
        operands = [x_in,
                    jnp.tile(scale, W).reshape(1, 1, W * C),
                    jnp.tile(bias, W).reshape(1, 1, W * C)]
        in_specs = [pl.BlockSpec((NB, H, W * C), lambda n: (n, 0, 0)),
                    pl.BlockSpec((1, 1, W * C), lambda n: (0, 0, 0)),
                    pl.BlockSpec((1, 1, W * C), lambda n: (0, 0, 0))]
        if pool_type == "avg":
            inv = _avg_inv_counts(H, W, H_out, W_out, K, S, P)
            operands.append(jnp.repeat(inv, C, axis=-1).reshape(1, H_out, W_out * C))
            in_specs.append(pl.BlockSpec((1, H_out, W_out * C), lambda n: (0, 0, 0)))
        out_specs = pl.BlockSpec((NB, H_out, W_out * C), lambda n: (n, 0, 0))
        out_shape = jax.ShapeDtypeStruct((N_pad, H_out, W_out * C), io_dtype)
        scratch_shapes = [pltpu.VMEM((NB, Hp, Wp * C), jnp.float32),
                          pltpu.VMEM((NB, Hp, W_out * C), jnp.float32)]
        kernel = functools.partial(_poolbn_s1_kernel, pool_type, K=K, P=P, H=H, W=W,
                                   H_out=H_out, W_out=W_out, C=C, NB=NB)
    else:
        # Strided pools: separable unfused-NHWC path (C on lanes).
        x_in = x_nhwc
        if N_pad != N:
            x_in = jnp.pad(x_in, ((0, N_pad - N), (0, 0), (0, 0), (0, 0)))
        operands = [x_in,
                    scale.reshape(1, 1, 1, C),
                    bias.reshape(1, 1, 1, C)]
        in_specs = [pl.BlockSpec((NB, H, W, C), lambda n: (n, 0, 0, 0)),
                    pl.BlockSpec((1, 1, 1, C), lambda n: (0, 0, 0, 0)),
                    pl.BlockSpec((1, 1, 1, C), lambda n: (0, 0, 0, 0))]
        if pool_type == "avg":
            inv = _avg_inv_counts(H, W, H_out, W_out, K, S, P)
            operands.append(inv.reshape(1, H_out, W_out, 1))
            in_specs.append(pl.BlockSpec((1, H_out, W_out, 1), lambda n: (0, 0, 0, 0)))
        out_specs = pl.BlockSpec((NB, H_out, W_out, C), lambda n: (n, 0, 0, 0))
        out_shape = jax.ShapeDtypeStruct((N_pad, H_out, W_out, C), io_dtype)
        scratch_shapes = [pltpu.VMEM((NB, Hp, Wp, C), jnp.float32),
                          pltpu.VMEM((NB, H_out, Wp, C), jnp.float32)]
        kernel = functools.partial(_poolbn_strided_kernel, pool_type, K=K, S=S, P=P,
                                   H=H, W=W, H_out=H_out, W_out=W_out, C=C, NB=NB)

    out = pl.pallas_call(
        kernel,
        grid=(grid_n,),
        in_specs=in_specs,
        out_specs=out_specs,
        out_shape=out_shape,
        scratch_shapes=scratch_shapes,
        compiler_params=pltpu.CompilerParams(
            dimension_semantics=("parallel",),
            vmem_limit_bytes=int(vmem_limit)),
    )(*operands)

    if N_pad != N:
        out = out[:N]
    return out.reshape(N, H_out, W_out, C)


def poolbn_forward(x_nchw, params, *, pool_type, kernel_size, stride, padding,
                   eps=1e-5, training=True):
    """PyTorch-interface (NCHW) wrapper.  The two transposes below are boundary layout
    plumbing only; NHWC pipelines should call poolbn_forward_nhwc (no transposes)."""
    x_nhwc = jnp.transpose(x_nchw, (0, 2, 3, 1))
    out_nhwc = poolbn_forward_nhwc(
        x_nhwc, params, pool_type=pool_type, kernel_size=kernel_size,
        stride=stride, padding=padding, eps=eps, training=training)
    return jnp.transpose(out_nhwc, (0, 3, 1, 2))


# ---------------------------------------------------------------------------
# Pure-JAX reference and demo
# ---------------------------------------------------------------------------

def poolbn_reference(x_nchw, params, *, pool_type, kernel_size, stride, padding,
                     eps=1e-5, training=True):
    """Pure-JAX reference mirroring the PyTorch forward (BN -> pool)."""
    N, C, H, W = x_nchw.shape
    gamma, beta = params["bn_gamma"], params["bn_beta"]
    if training:
        mean = jnp.mean(x_nchw, axis=(0, 2, 3))
        var = jnp.var(x_nchw, axis=(0, 2, 3))
    else:
        mean, var = params["bn_running_mean"], params["bn_running_var"]
    scale = gamma * lax.rsqrt(var + eps)
    bias = beta - mean * scale
    a = x_nchw * scale[None, :, None, None] + bias[None, :, None, None]

    K, S, P = kernel_size, stride, padding
    pad4 = [(0, 0), (0, 0), (P, P), (P, P)]
    if pool_type == "max":
        return lax.reduce_window(a, jnp.float32(-jnp.inf), lax.max,
                                 (1, 1, K, K), (1, 1, S, S), pad4)
    s = lax.reduce_window(a, jnp.float32(0.0), lax.add,
                          (1, 1, K, K), (1, 1, S, S), pad4)
    ones = jnp.ones((H, W), jnp.float32)
    cnt = lax.reduce_window(ones, jnp.float32(0.0), lax.add,
                            (K, K), (S, S), [(P, P), (P, P)])
    return s / cnt[None, None, :, :]


def init_params(key, C):
    ks = jax.random.split(key, 4)
    return {
        "bn_gamma": jax.random.uniform(ks[0], (C,), jnp.float32, 0.5, 1.5),
        "bn_beta": 0.1 * jax.random.normal(ks[1], (C,), jnp.float32),
        "bn_running_mean": 0.1 * jax.random.normal(ks[2], (C,), jnp.float32),
        "bn_running_var": jax.random.uniform(ks[3], (C,), jnp.float32, 0.5, 1.5),
    }


if __name__ == "__main__":
    N, C, H, W = 2, 4, 16, 16
    kernel_size, stride, padding = 3, 1, 1

    key = jax.random.PRNGKey(0)
    kx, kp = jax.random.split(key)
    x = jax.random.normal(kx, (N, C, H, W), jnp.float32)
    params = init_params(kp, C)

    for pool_type in ("max", "avg"):
        out = poolbn_forward(x, params, pool_type=pool_type, kernel_size=kernel_size,
                             stride=stride, padding=padding)
        out = jax.block_until_ready(out)

        ref = poolbn_reference(x, params, pool_type=pool_type, kernel_size=kernel_size,
                               stride=stride, padding=padding)
        ref = jax.block_until_ready(ref)

        assert out.shape == ref.shape, (pool_type, out.shape, ref.shape)
        max_err = float(jnp.max(jnp.abs(out - ref)))
        assert max_err < 1e-4, f"{pool_type}: max abs error {max_err}"

    print("KERNEL_OK")
</pallas_src>

<mosaic_0001>
module attributes {stable_mosaic.version = 11 : i64} {
  func.func @_poolbn_s1_kernel(%arg0: i32, %arg1: memref<2x16x64xf32, #tpu.memory_space<vmem>>, %arg2: memref<1x1x64xf32, #tpu.memory_space<vmem>>, %arg3: memref<1x1x64xf32, #tpu.memory_space<vmem>>, %arg4: memref<2x16x64xf32, #tpu.memory_space<vmem>>, %arg5: memref<2x18x72xf32, #tpu.memory_space<vmem>>, %arg6: memref<2x18x64xf32, #tpu.memory_space<vmem>>) attributes {dimension_semantics = [#tpu.dimension_semantics<parallel>], iteration_bounds = array<i64: 1>, scalar_prefetch = 0 : i64, scratch_operands = 2 : i64, tpu.core_type = #tpu.core_type<tc>, window_params = [{transform_indices = @transform_0, window_bounds = array<i64: 2, 16, 64>}, {pipeline_mode = #tpu.pipeline_mode<synchronous>, transform_indices = @transform_1, window_bounds = array<i64: 1, 1, 64>}, {pipeline_mode = #tpu.pipeline_mode<synchronous>, transform_indices = @transform_2, window_bounds = array<i64: 1, 1, 64>}, {transform_indices = @transform_3, window_bounds = array<i64: 2, 16, 64>}]} {
    %cst = arith.constant 0xFF800000 : f32
    %0 = vector.broadcast %cst : f32 to vector<2x1x72xf32>
    %c0 = arith.constant 0 : index
    %c0_0 = arith.constant 0 : index
    %c0_1 = arith.constant 0 : index
    %1 = vector.load %arg5[%c0, %c0_0, %c0_1] : memref<2x18x72xf32, #tpu.memory_space<vmem>>, vector<2x1x72xf32>
    tpu.vector_store %arg5[%c0, %c0_0, %c0_1], %0 {strides = array<i32>} : memref<2x18x72xf32, #tpu.memory_space<vmem>>, vector<2x1x72xf32>,
    %cst_2 = arith.constant 0xFF800000 : f32
    %2 = vector.broadcast %cst_2 : f32 to vector<2x1x72xf32>
    %c0_3 = arith.constant 0 : index
    %c17 = arith.constant 17 : index
    %c0_4 = arith.constant 0 : index
    %3 = vector.load %arg5[%c0_3, %c17, %c0_4] : memref<2x18x72xf32, #tpu.memory_space<vmem>>, vector<2x1x72xf32>
    tpu.vector_store %arg5[%c0_3, %c17, %c0_4], %2 {strides = array<i32>} : memref<2x18x72xf32, #tpu.memory_space<vmem>>, vector<2x1x72xf32>,
    %cst_5 = arith.constant 0xFF800000 : f32
    %4 = vector.broadcast %cst_5 : f32 to vector<2x16x4xf32>
    %c0_6 = arith.constant 0 : index
    %c1 = arith.constant 1 : index
    %c0_7 = arith.constant 0 : index
    %5 = vector.load %arg5[%c0_6, %c1, %c0_7] : memref<2x18x72xf32, #tpu.memory_space<vmem>>, vector<2x16x4xf32>
    tpu.vector_store %arg5[%c0_6, %c1, %c0_7], %4 {strides = array<i32>} : memref<2x18x72xf32, #tpu.memory_space<vmem>>, vector<2x16x4xf32>,
    %cst_8 = arith.constant 0xFF800000 : f32
    %6 = vector.broadcast %cst_8 : f32 to vector<2x16x4xf32>
    %c0_9 = arith.constant 0 : index
    %c1_10 = arith.constant 1 : index
    %c68 = arith.constant 68 : index
    %7 = vector.load %arg5[%c0_9, %c1_10, %c68] : memref<2x18x72xf32, #tpu.memory_space<vmem>>, vector<2x16x4xf32>
    tpu.vector_store %arg5[%c0_9, %c1_10, %c68], %6 {strides = array<i32>} : memref<2x18x72xf32, #tpu.memory_space<vmem>>, vector<2x16x4xf32>,
    %c0_11 = arith.constant 0 : index
    %c0_12 = arith.constant 0 : index
    %c0_13 = arith.constant 0 : index
    %8 = vector.load %arg1[%c0_11, %c0_12, %c0_13] : memref<2x16x64xf32, #tpu.memory_space<vmem>>, vector<2x16x64xf32>
    %c0_14 = arith.constant 0 : index
    %c0_15 = arith.constant 0 : index
    %c0_16 = arith.constant 0 : index
    %9 = vector.load %arg2[%c0_14, %c0_15, %c0_16] : memref<1x1x64xf32, #tpu.memory_space<vmem>>, vector<1x1x64xf32>
    %10 = vector.broadcast %9 : vector<1x1x64xf32> to vector<2x16x64xf32>
    %11 = arith.mulf %8, %10 : vector<2x16x64xf32>
    %c0_17 = arith.constant 0 : index
    %c0_18 = arith.constant 0 : index
    %c0_19 = arith.constant 0 : index
    %12 = vector.load %arg3[%c0_17, %c0_18, %c0_19] : memref<1x1x64xf32, #tpu.memory_space<vmem>>, vector<1x1x64xf32>
    %13 = vector.broadcast %12 : vector<1x1x64xf32> to vector<2x16x64xf32>
    %14 = arith.addf %11, %13 : vector<2x16x64xf32>
    %c0_20 = arith.constant 0 : index
    %c1_21 = arith.constant 1 : index
    %c4 = arith.constant 4 : index
    %15 = vector.load %arg5[%c0_20, %c1_21, %c4] : memref<2x18x72xf32, #tpu.memory_space<vmem>>, vector<2x16x64xf32>
    tpu.vector_store %arg5[%c0_20, %c1_21, %c4], %14 {strides = array<i32>} : memref<2x18x72xf32, #tpu.memory_space<vmem>>, vector<2x16x64xf32>,
    %c0_22 = arith.constant 0 : index
    %c0_23 = arith.constant 0 : index
    %c0_24 = arith.constant 0 : index
    %16 = vector.load %arg5[%c0_22, %c0_23, %c0_24] : memref<2x18x72xf32, #tpu.memory_space<vmem>>, vector<2x18x64xf32>
    %c0_25 = arith.constant 0 : index
    %c0_26 = arith.constant 0 : index
    %c4_27 = arith.constant 4 : index
    %17 = vector.load %arg5[%c0_25, %c0_26, %c4_27] : memref<2x18x72xf32, #tpu.memory_space<vmem>>, vector<2x18x64xf32>
    %18 = arith.maximumf %16, %17 : vector<2x18x64xf32>
    %c0_28 = arith.constant 0 : index
    %c0_29 = arith.constant 0 : index
    %c8 = arith.constant 8 : index
    %19 = vector.load %arg5[%c0_28, %c0_29, %c8] : memref<2x18x72xf32, #tpu.memory_space<vmem>>, vector<2x18x64xf32>
    %20 = arith.maximumf %18, %19 : vector<2x18x64xf32>
    %c0_30 = arith.constant 0 : index
    %c0_31 = arith.constant 0 : index
    %c0_32 = arith.constant 0 : index
    %21 = vector.load %arg6[%c0_30, %c0_31, %c0_32] : memref<2x18x64xf32, #tpu.memory_space<vmem>>, vector<2x18x64xf32>
    tpu.vector_store %arg6[%c0_30, %c0_31, %c0_32], %20 {strides = array<i32>} : memref<2x18x64xf32, #tpu.memory_space<vmem>>, vector<2x18x64xf32>,
    %c0_33 = arith.constant 0 : index
    %c0_34 = arith.constant 0 : index
    %c0_35 = arith.constant 0 : index
    %22 = vector.load %arg6[%c0_33, %c0_34, %c0_35] : memref<2x18x64xf32, #tpu.memory_space<vmem>>, vector<2x16x64xf32>
    %c0_36 = arith.constant 0 : index
    %c1_37 = arith.constant 1 : index
    %c0_38 = arith.constant 0 : index
    %23 = vector.load %arg6[%c0_36, %c1_37, %c0_38] : memref<2x18x64xf32, #tpu.memory_space<vmem>>, vector<2x16x64xf32>
    %24 = arith.maximumf %22, %23 : vector<2x16x64xf32>
    %c0_39 = arith.constant 0 : index
    %c2 = arith.constant 2 : index
    %c0_40 = arith.constant 0 : index
    %25 = vector.load %arg6[%c0_39, %c2, %c0_40] : memref<2x18x64xf32, #tpu.memory_space<vmem>>, vector<2x16x64xf32>
    %26 = arith.maximumf %24, %25 : vector<2x16x64xf32>
    %c0_41 = arith.constant 0 : index
    %c0_42 = arith.constant 0 : index
    %c0_43 = arith.constant 0 : index
    %27 = vector.load %arg4[%c0_41, %c0_42, %c0_43] : memref<2x16x64xf32, #tpu.memory_space<vmem>>, vector<2x16x64xf32>
    tpu.vector_store %arg4[%c0_41, %c0_42, %c0_43], %26 {strides = array<i32>} : memref<2x16x64xf32, #tpu.memory_space<vmem>>, vector<2x16x64xf32>,
    return
  }
  func.func @transform_0(%arg0: i32) -> (i32, i32, i32) {
    %c0_i32 = arith.constant 0 : i32
    %c0_i32_0 = arith.constant 0 : i32
    %c0_i32_1 = arith.constant 0 : i32
    return %arg0, %c0_i32, %c0_i32_0 : i32, i32, i32
  }
  func.func @transform_1(%arg0: i32) -> (i32, i32, i32) {
    %c0_i32 = arith.constant 0 : i32
    %c0_i32_0 = arith.constant 0 : i32
    %c0_i32_1 = arith.constant 0 : i32
    %c0_i32_2 = arith.constant 0 : i32
    return %c0_i32, %c0_i32_0, %c0_i32_1 : i32, i32, i32
  }
  func.func @transform_2(%arg0: i32) -> (i32, i32, i32) {
    %c0_i32 = arith.constant 0 : i32
    %c0_i32_0 = arith.constant 0 : i32
    %c0_i32_1 = arith.constant 0 : i32
    %c0_i32_2 = arith.constant 0 : i32
    return %c0_i32, %c0_i32_0, %c0_i32_1 : i32, i32, i32
  }
  func.func @transform_3(%arg0: i32) -> (i32, i32, i32) {
    %c0_i32 = arith.constant 0 : i32
    %c0_i32_0 = arith.constant 0 : i32
    %c0_i32_1 = arith.constant 0 : i32
    return %arg0, %c0_i32, %c0_i32_0 : i32, i32, i32
  }
}

</mosaic_0001>

<llo_original>
// kernel: tpu_custom_call.1
$region0: #{tpu_custom_call.1}
  #allocation0 [shape = 'u32[]', space=smem, size = 0x4, offset = 0x4, fixed_abs, tag = 'smem constant byte address 0x4 - core index']
  #allocation1 [shape = 'u32[144,128]{1,0:T(1,128)}', space=vmem, size = 0x12000, scoped, tag = 'internal scratch']
  #allocation2 [shape = 'f32[2,18,72]{2,1,0:T(8,128)}', space=vmem, size = 0x6000, scoped, tag = 'scratch operand']
  #allocation3 [shape = 'f32[2,18,64]{2,1,0:T(8,128)}', space=vmem, size = 0x6000, scoped, tag = 'scratch operand']
  %s0 = inlined_call_operand.hbm [shape: f32[2,16,64], index: 0, kind: input, shape index: {}]
  %s1 = inlined_call_operand.vmem [shape: f32[1,1,64], index: 1, kind: input, shape index: {}]
  %s2 = inlined_call_operand.vmem [shape: f32[1,1,64], index: 2, kind: input, shape index: {}]
  %s3 = inlined_call_operand.hbm [shape: f32[2,16,64], index: 3, kind: output, shape index: {}]
  %s4 = sld [smem:[#allocation0]]
  $region26: #{tpu_custom_call.1} parent=0
    _
  %s6 = ssub.s32 1, %s4
  %s7 = scalar_select 0, %s6, %s4
  $region1: #{tpu_custom_call.1} parent=0
    #allocation4 [shape = 'u8[16384]{0}', space=vmem, size = 0x4000, scoped, tag = 'input window, operand 0, single buffered']
    #allocation5 [shape = 's32[1]{0}', space=sflag, size = 0x4, scoped, tag = 'scoped memory for tpu_custom_call.1']
    #allocation6 [shape = 's32[1]{0}', space=sflag, size = 0x4, scoped, tag = 'scoped memory for tpu_custom_call.1']
    #allocation7 [shape = 'u8[16384]{0}', space=vmem, size = 0x4000, scoped, tag = 'output window, operand 0, single buffered']
    %8 = vsyncpa [#allocation5], 0
    %9 = vsyncpa [#allocation6], 0
    // Predicated region
    $region2: #{tpu_custom_call.1} parent=1 // pred_check
      _
    $region3: #{tpu_custom_call.1} parent=1 // pred_check_branch
      %11 = sbr.rel (0) target = $region5
    $region4: #{tpu_custom_call.1} parent=1 // pred_region
      %s13 = ssub.s32 512, 512
      %14 = vsyncadd [#allocation5], %s13
      %s15 = sshll.u32 [#allocation4], 4
      %s16 = int_to_ptr.vmem [resolvable:$true] %s15
      %21 = dma.hbm_to_vmem [thread:$0]  %s0, 512, %s16, [#allocation5], 128, 128, 8
    $region5: #{tpu_custom_call.1} parent=1 // pred_fallthru
      _
    // Predicated region
    $region6: #{tpu_custom_call.1} parent=1 // pred_check
      _
    $region7: #{tpu_custom_call.1} parent=1 // pred_check_branch
      %23 = sbr.rel (0) target = $region9
    $region8: #{tpu_custom_call.1} parent=1 // pred_region
      _
    $region9: #{tpu_custom_call.1} parent=1 // pred_fallthru
      _
    // Predicated region
    $region10: #{tpu_custom_call.1} parent=1 // pred_check
      _
    $region11: #{tpu_custom_call.1} parent=1 // pred_check_branch
      %25 = sbr.rel (0) target = $region13
    $region12: #{tpu_custom_call.1} parent=1 // pred_region
      _
    $region13: #{tpu_custom_call.1} parent=1 // pred_fallthru
      _
    // Predicated region
    $region14: #{tpu_custom_call.1} parent=1 // pred_check
      _
    $region15: #{tpu_custom_call.1} parent=1 // pred_check_branch
      %27 = sbr.rel (0) target = $region17
    $region16: #{tpu_custom_call.1} parent=1 // pred_region
      %28 = dma.done [#allocation5], 512
    $region17: #{tpu_custom_call.1} parent=1 // pred_fallthru
      _
    %vm29 = vcmask 581632
    %30 = vst.msk [vmem:[#allocation2] sm:$0x1] %vm29, -inf
    %31 = vst.msk [vmem:[#allocation2 + $0x18] sm:$0x1] %vm29, -inf
    %32 = vst.msk [vmem:[#allocation2 + $0x11] sm:$0x1] %vm29, -inf
    %33 = vst.msk [vmem:[#allocation2 + $0x29] sm:$0x1] %vm29, -inf
    %vm34 = vcmask 31744
    %35 = vst.msk [vmem:[#allocation2 + $0x1] sm:$0xff] %vm34, -inf
    %36 = vst.msk [vmem:[#allocation2 + $0x9] sm:$0xff] %vm34, -inf
    %37 = vst.msk [vmem:[#allocation2 + $0x19] sm:$0xff] %vm34, -inf
    %38 = vst.msk [vmem:[#allocation2 + $0x21] sm:$0xff] %vm34, -inf
    %vm39 = vcmask 589344
    %40 = vst.msk [vmem:[#allocation2 + $0x1] sm:$0xff] %vm39, -inf
    %41 = vst.msk [vmem:[#allocation2 + $0x9] sm:$0xff] %vm39, -inf
    %42 = vst.msk [vmem:[#allocation2 + $0x19] sm:$0xff] %vm39, -inf
    %43 = vst.msk [vmem:[#allocation2 + $0x21] sm:$0xff] %vm39, -inf
    %v44 = vld [vmem:[#allocation4] sm:$0xff]
    %v45 = vld [vmem:[#allocation4 + $0x8] sm:$0xff]
    %v46 = vld [vmem:[#allocation4 + $0x10] sm:$0xff]
    %v47 = vld [vmem:[#allocation4 + $0x18] sm:$0xff]
    %v48 = vld [vmem:[%s1] sm:$0x1]
    %v50 = vlaneseq
    %v51 = vshrl.u32 %v50, 7
    %v52 = vsub.s32 0, %v51
    %v53 = vrot.slane %v48, %v52
    %v55 = vmul.f32 %v44, %v53
    %v56 = vmul.f32 %v45, %v53
    %v57 = vmul.f32 %v46, %v53
    %v58 = vmul.f32 %v47, %v53
    %v59 = vld [vmem:[%s2] sm:$0x1]
    %v61 = vlaneseq
    %v62 = vshrl.u32 %v61, 7
    %v63 = vsub.s32 0, %v62
    %v64 = vrot.slane %v59, %v63
    %v66 = vadd.f32 %v55, %v64
    %v67 = vadd.f32 %v56, %v64
    %v68 = vadd.f32 %v57, %v64
    %v69 = vadd.f32 %v58, %v64
    %74 = vrot.lane.b32.xlu0 %v66, 4
    %v75 = vpop.permute.xlu0 %74
    %76 = vrot.lane.b32.xlu0 %v67, 4
    %v77 = vpop.permute.xlu0 %76
    %78 = vrot.lane.b32.xlu0 %v68, 4
    %v79 = vpop.permute.xlu0 %78
    %80 = vrot.lane.b32.xlu0 %v69, 4
    %v81 = vpop.permute.xlu0 %80
    %vm86 = vcmask 556064
    %87 = vst.msk [vmem:[#allocation2 + $0x1] sm:$0xff] %vm86, %v75
    %88 = vst.msk [vmem:[#allocation2 + $0x9] sm:$0xff] %vm86, %v77
    %89 = vst.msk [vmem:[#allocation2 + $0x19] sm:$0xff] %vm86, %v79
    %90 = vst.msk [vmem:[#allocation2 + $0x21] sm:$0xff] %vm86, %v81
    %v91 = vld [vmem:[#allocation2] sm:$0xff]
    %v92 = vld [vmem:[#allocation2 + $0x8] sm:$0xff]
    %v93 = vld [vmem:[#allocation2 + $0x10] sm:$0x3]
    %v94 = vld [vmem:[#allocation2 + $0x18] sm:$0xff]
    %v95 = vld [vmem:[#allocation2 + $0x20] sm:$0xff]
    %v96 = vld [vmem:[#allocation2 + $0x28] sm:$0x3]
    %103 = vrot.lane.b32.xlu0 %v91, 124
    %v104 = vpop.permute.xlu0 %103
    %105 = vrot.lane.b32.xlu0 %v92, 124
    %v106 = vpop.permute.xlu0 %105
    %107 = vrot.lane.b32.xlu0 %v93, 124
    %v108 = vpop.permute.xlu0 %107
    %109 = vrot.lane.b32.xlu0 %v94, 124
    %v110 = vpop.permute.xlu0 %109
    %111 = vrot.lane.b32.xlu0 %v95, 124
    %v112 = vpop.permute.xlu0 %111
    %113 = vrot.lane.b32.xlu0 %v96, 124
    %v114 = vpop.permute.xlu0 %113
    %v121 = vmax.f32 %v91, %v104
    %v122 = vmax.f32 %v92, %v106
    %v123 = vmax.f32 %v93, %v108
    %v124 = vmax.f32 %v94, %v110
    %v125 = vmax.f32 %v95, %v112
    %v126 = vmax.f32 %v96, %v114
    %127 = vrot.lane.b32.xlu0 %v91, 120
    %v128 = vpop.permute.xlu0 %127
    %129 = vrot.lane.b32.xlu0 %v92, 120
    %v130 = vpop.permute.xlu0 %129
    %131 = vrot.lane.b32.xlu0 %v93, 120
    %v132 = vpop.permute.xlu0 %131
    %133 = vrot.lane.b32.xlu0 %v94, 120
    %v134 = vpop.permute.xlu0 %133
    %135 = vrot.lane.b32.xlu0 %v95, 120
    %v136 = vpop.permute.xlu0 %135
    %137 = vrot.lane.b32.xlu0 %v96, 120
    %v138 = vpop.permute.xlu0 %137
    %v145 = vmax.f32 %v121, %v128
    %v146 = vmax.f32 %v122, %v130
    %v147 = vmax.f32 %v123, %v132
    %v148 = vmax.f32 %v124, %v134
    %v149 = vmax.f32 %v125, %v136
    %v150 = vmax.f32 %v126, %v138
    %vm151 = vcmask 523264
    %152 = vst.msk [vmem:[#allocation3] sm:$0xff] %vm151, %v145
    %153 = vst.msk [vmem:[#allocation3 + $0x8] sm:$0xff] %vm151, %v146
    %vm154 = vcmask 517120
    %155 = vst.msk [vmem:[#allocation3 + $0x10] sm:$0x3] %vm154, %v147
    %156 = vst.msk [vmem:[#allocation3 + $0x18] sm:$0xff] %vm151, %v148
    %157 = vst.msk [vmem:[#allocation3 + $0x20] sm:$0xff] %vm151, %v149
    %158 = vst.msk [vmem:[#allocation3 + $0x28] sm:$0x3] %vm154, %v150
    %v159 = vld [vmem:[#allocation3] sm:$0xff]
    %v160 = vld [vmem:[#allocation3 + $0x8] sm:$0xff]
    %v161 = vld [vmem:[#allocation3 + $0x18] sm:$0xff]
    %v162 = vld [vmem:[#allocation3 + $0x20] sm:$0xff]
    %v163 = vld [vmem:[#allocation3 + $0x1] sm:$0xff]
    %v164 = vld [vmem:[#allocation3 + $0x9] sm:$0xff]
    %v165 = vld [vmem:[#allocation3 + $0x19] sm:$0xff]
    %v166 = vld [vmem:[#allocation3 + $0x21] sm:$0xff]
    %v167 = vmax.f32 %v159, %v163
    %v168 = vmax.f32 %v160, %v164
    %v169 = vmax.f32 %v161, %v165
    %v170 = vmax.f32 %v162, %v166
    %v171 = vld [vmem:[#allocation3 + $0x2] sm:$0xff]
    %v172 = vld [vmem:[#allocation3 + $0xa] sm:$0xff]
    %v173 = vld [vmem:[#allocation3 + $0x1a] sm:$0xff]
    %v174 = vld [vmem:[#allocation3 + $0x22] sm:$0xff]
    %v175 = vmax.f32 %v167, %v171
    %v176 = vmax.f32 %v168, %v172
    %v177 = vmax.f32 %v169, %v173
    %v178 = vmax.f32 %v170, %v174
    %179 = vst.msk [vmem:[#allocation7] sm:$0xff] %vm151, %v175
    %180 = vst.msk [vmem:[#allocation7 + $0x8] sm:$0xff] %vm151, %v176
    %181 = vst.msk [vmem:[#allocation7 + $0x10] sm:$0xff] %vm151, %v177
    %182 = vst.msk [vmem:[#allocation7 + $0x18] sm:$0xff] %vm151, %v178
    // Predicated region
    $region18: #{tpu_custom_call.1} parent=1 // pred_check
      _
    $region19: #{tpu_custom_call.1} parent=1 // pred_check_branch
      %184 = sbr.rel (0) target = $region21
    $region20: #{tpu_custom_call.1} parent=1 // pred_region
      %s186 = ssub.s32 512, 512
      %187 = vsyncadd [#allocation6], %s186
      %s188 = sshll.u32 [#allocation7], 4
      %s189 = int_to_ptr.vmem [resolvable:$true] %s188
      %194 = dma.vmem_to_hbm [thread:$0]  %s189, 512, %s3, [#allocation6], 128, 128, 8
    $region21: #{tpu_custom_call.1} parent=1 // pred_fallthru
      _
    // Predicated region
    $region22: #{tpu_custom_call.1} parent=1 // pred_check
      _
    $region23: #{tpu_custom_call.1} parent=1 // pred_check_branch
      %196 = sbr.rel (0) target = $region25
    $region24: #{tpu_custom_call.1} parent=1 // pred_region
      %197 = dma.done [#allocation6], 512
    $region25: #{tpu_custom_call.1} parent=1 // pred_fallthru
      _
    %198 = vsyncpa [#allocation5], 1
    %199 = vsyncpa [#allocation6], 1

</llo_original>
